<compile_context>
chip_gen: v5e
topology: v5e:2x2
jax: 0.10.0
libtpu: 0.0.40
codegen_flags: <defaults>
</compile_context>

<pallas_src>
import jax
import jax.numpy as jnp
from jax import lax
from jax.experimental import pallas as pl
from jax.experimental.pallas import tpu as pltpu

_EPS = 1e-12          # F.normalize default eps (clamp on the norm)
_EPS2 = _EPS * _EPS   # equivalent clamp on the squared norm (rsqrt form)


# ------------------------------- Pallas kernel ------------------------------ #

def _contrastive_kernel(sb_ref, x_ref, w_ref, o_ref):
    """Fused ContrastiveHead for one (batch, HW-tile) grid point.

    sb_ref: (2,) f32 in SMEM   -> [exp(logit_scale), bias]
    x_ref : (1, C, T) VMEM     -> image features, T spatial positions on lanes
    w_ref : (1, K, C) VMEM     -> text embeddings
    o_ref : (1, K, T) VMEM     -> region-text logits
    """
    x = x_ref[0]                               # (C, T), native dtype
    w = w_ref[0].astype(jnp.float32)           # (K, C)
    scale = sb_ref[0]                          # exp(logit_scale)
    bias = sb_ref[1]

    # L2-normalize text embeddings over C (f32), folding the logit scale in
    # (K multiplies instead of K*T in the epilogue).  rsqrt -> EUP slot.
    w_ssq = jnp.sum(w * w, axis=1, keepdims=True)                    # (K, 1)
    wn = w * (scale * lax.rsqrt(jnp.maximum(w_ssq, _EPS2)))          # (K, C)

    # Per-column inverse norm of the image features over C.  Applied to the
    # (K, T) matmul OUTPUT instead of the (C, T) input — same math, fewer ops.
    xf = x.astype(jnp.float32)
    x_ssq = jnp.sum(xf * xf, axis=0, keepdims=True)                  # (1, T)
    x_inv = lax.rsqrt(jnp.maximum(x_ssq, _EPS2))                     # (1, T)

    # Channel contraction on the MXU: (K, C) @ (C, T) -> (K, T), f32 accum.
    # Run in the input dtype so bf16 inputs hit the fast MXU path.
    y = jnp.dot(wn.astype(x.dtype), x, preferred_element_type=jnp.float32)

    o_ref[0] = (y * x_inv + bias).astype(o_ref.dtype)


# --------------------------------- wrapper ---------------------------------- #

def _pick_tile(hw, c, itemsize, vmem_budget=8 << 20):
    """Largest lane-dense tile of the flattened spatial axis (multiple of 128)
    that divides HW and keeps the double-buffered x block within budget."""
    for t in (2048, 1024, 512, 256, 128):
        if hw % t == 0 and 2 * c * t * itemsize <= vmem_budget:
            return t
    return hw  # fall back to the full (possibly unaligned) extent


@jax.jit
def contrastive_head(x, w, logit_scale, bias):
    """x: (B, C, H, W) image features (NCHW, as in PyTorch).
       w: (B, K, C) text embeddings.
       logit_scale, bias: scalar parameters.
       returns: (B, K, H, W) region-text scores."""
    B, C, H, W = x.shape
    K = w.shape[1]
    HW = H * W
    T = _pick_tile(HW, C, jnp.dtype(x.dtype).itemsize)

    # Contiguous reshape only — no transpose / relayout passes.
    x2 = x.reshape(B, C, HW)
    sb = jnp.stack([jnp.exp(logit_scale), bias]).astype(jnp.float32)

    out = pl.pallas_call(
        _contrastive_kernel,
        out_shape=jax.ShapeDtypeStruct((B, K, HW), x.dtype),
        grid=(B, HW // T),
        in_specs=[
            pl.BlockSpec(memory_space=pltpu.MemorySpace.SMEM),        # scalars
            pl.BlockSpec((1, C, T), lambda b, t: (b, 0, t)),          # x tile
            pl.BlockSpec((1, K, C), lambda b, t: (b, 0, 0)),          # w (per batch)
        ],
        out_specs=pl.BlockSpec((1, K, T), lambda b, t: (b, 0, t)),
        compiler_params=pltpu.CompilerParams(
            dimension_semantics=("parallel", "parallel")),
    )(sb, x2, w)

    return out.reshape(B, K, H, W)


# ----------------------------- pure-JAX reference --------------------------- #

def contrastive_reference(x, w, logit_scale, bias):
    xn = x / jnp.maximum(
        jnp.sqrt(jnp.sum(x * x, axis=1, keepdims=True)), _EPS)
    wn = w / jnp.maximum(
        jnp.sqrt(jnp.sum(w * w, axis=-1, keepdims=True)), _EPS)
    y = jnp.einsum("bchw,bkc->bkhw", xn, wn,
                   precision=jax.lax.Precision.HIGHEST)
    return y * jnp.exp(logit_scale) + bias


# ----------------------------------- main ------------------------------------ #

if __name__ == "__main__":
    # Small shapes implied by the forward: B=2 batch, C=32 embedding channels,
    # K=8 text queries, 16x16 spatial.
    B, C, K, H, W = 2, 32, 8, 16, 16

    key = jax.random.PRNGKey(0)
    kx, kw = jax.random.split(key)
    x = jax.random.normal(kx, (B, C, H, W), jnp.float32)
    w = jax.random.normal(kw, (B, K, C), jnp.float32)

    # Module's initial parameter values: bias = 0, logit_scale = log(1/0.07).
    logit_scale = jnp.log(jnp.float32(1.0 / 0.07))
    bias = jnp.float32(0.0)

    out = jax.block_until_ready(contrastive_head(x, w, logit_scale, bias))
    ref = jax.block_until_ready(contrastive_reference(x, w, logit_scale, bias))

    assert out.shape == (B, K, H, W), out.shape
    assert jnp.allclose(out, ref, atol=1e-3, rtol=1e-3), (
        float(jnp.max(jnp.abs(out - ref))))

    print("KERNEL_OK")
</pallas_src>

<mosaic_0001>
module attributes {stable_mosaic.version = 11 : i64} {
  func.func @_contrastive_kernel(%arg0: i32, %arg1: i32, %arg2: memref<2xf32, #tpu.memory_space<smem>>, %arg3: memref<1x32x256xf32, #tpu.memory_space<vmem>>, %arg4: memref<1x8x32xf32, #tpu.memory_space<vmem>>, %arg5: memref<1x8x256xf32, #tpu.memory_space<vmem>>) attributes {dimension_semantics = [#tpu.dimension_semantics<parallel>, #tpu.dimension_semantics<parallel>], iteration_bounds = array<i64: 2, 1>, scalar_prefetch = 0 : i64, scratch_operands = 0 : i64, tpu.core_type = #tpu.core_type<tc>, window_params = [{transform_indices = @transform_0, window_bounds = array<i64: 2>}, {transform_indices = @transform_1, window_bounds = array<i64: 1, 32, 256>}, {transform_indices = @transform_2, window_bounds = array<i64: 1, 8, 32>}, {transform_indices = @transform_3, window_bounds = array<i64: 1, 8, 256>}]} {
    %c0 = arith.constant 0 : index
    %c0_0 = arith.constant 0 : index
    %c0_1 = arith.constant 0 : index
    %0 = vector.load %arg3[%c0, %c0_0, %c0_1] : memref<1x32x256xf32, #tpu.memory_space<vmem>>, vector<1x32x256xf32>
    %1 = vector.shape_cast %0 : vector<1x32x256xf32> to vector<32x256xf32>
    %c0_2 = arith.constant 0 : index
    %c0_3 = arith.constant 0 : index
    %c0_4 = arith.constant 0 : index
    %2 = vector.load %arg4[%c0_2, %c0_3, %c0_4] : memref<1x8x32xf32, #tpu.memory_space<vmem>>, vector<1x8x32xf32>
    %3 = vector.shape_cast %2 : vector<1x8x32xf32> to vector<8x32xf32>
    %c0_5 = arith.constant 0 : index
    %4 = memref.load %arg2[%c0_5] : memref<2xf32, #tpu.memory_space<smem>>
    %c1 = arith.constant 1 : index
    %5 = memref.load %arg2[%c1] : memref<2xf32, #tpu.memory_space<smem>>
    %6 = arith.mulf %3, %3 : vector<8x32xf32>
    %cst = arith.constant dense<0.000000e+00> : vector<8xf32>
    %7 = vector.multi_reduction <add>, %6, %cst [1] : vector<8x32xf32> to vector<8xf32>
    %8 = vector.shape_cast %7 : vector<8xf32> to vector<8x1xf32>
    %cst_6 = arith.constant 1.000000e-24 : f32
    %9 = vector.broadcast %cst_6 : f32 to vector<8x1xf32>
    %10 = arith.maximumf %8, %9 : vector<8x1xf32>
    %11 = math.rsqrt %10 : vector<8x1xf32>
    %12 = vector.broadcast %4 : f32 to vector<8x1xf32>
    %13 = arith.mulf %12, %11 : vector<8x1xf32>
    %14 = vector.broadcast %13 : vector<8x1xf32> to vector<8x32xf32>
    %15 = arith.mulf %3, %14 : vector<8x32xf32>
    %16 = arith.mulf %1, %1 : vector<32x256xf32>
    %cst_7 = arith.constant dense<0.000000e+00> : vector<256xf32>
    %17 = vector.multi_reduction <add>, %16, %cst_7 [0] : vector<32x256xf32> to vector<256xf32>
    %18 = vector.shape_cast %17 : vector<256xf32> to vector<1x256xf32>
    %cst_8 = arith.constant 1.000000e-24 : f32
    %19 = vector.broadcast %cst_8 : f32 to vector<1x256xf32>
    %20 = arith.maximumf %18, %19 : vector<1x256xf32>
    %21 = math.rsqrt %20 : vector<1x256xf32>
    %cst_9 = arith.constant dense<0.000000e+00> : vector<8x256xf32>
    %22 = tpu.matmul %15, %1, %cst_9 {dimension_numbers = #tpu.dot_dimension_numbers<[1], [0], [0], [1], [0, 0, 1, 1], [], []>} : vector<8x32xf32>, vector<32x256xf32>, vector<8x256xf32> -> vector<8x256xf32>
    %23 = vector.broadcast %21 : vector<1x256xf32> to vector<8x256xf32>
    %24 = arith.mulf %22, %23 : vector<8x256xf32>
    %25 = vector.broadcast %5 : f32 to vector<8x256xf32>
    %26 = arith.addf %24, %25 : vector<8x256xf32>
    %c0_10 = arith.constant 0 : index
    %c0_11 = arith.constant 0 : index
    %c0_12 = arith.constant 0 : index
    %27 = vector.load %arg5[%c0_10, %c0_11, %c0_12] : memref<1x8x256xf32, #tpu.memory_space<vmem>>, vector<1x8x256xf32>
    %28 = vector.shape_cast %27 : vector<1x8x256xf32> to vector<8x256xf32>
    %29 = vector.shape_cast %26 : vector<8x256xf32> to vector<1x8x256xf32>
    tpu.vector_store %arg5[%c0_10, %c0_11, %c0_12], %29 {strides = array<i32>} : memref<1x8x256xf32, #tpu.memory_space<vmem>>, vector<1x8x256xf32>,
    return
  }
  func.func @transform_0(%arg0: i32, %arg1: i32) -> i32 {
    %c0_i32 = arith.constant 0 : i32
    %c0_i32_0 = arith.constant 0 : i32
    return %c0_i32 : i32
  }
  func.func @transform_1(%arg0: i32, %arg1: i32) -> (i32, i32, i32) {
    %c0_i32 = arith.constant 0 : i32
    %c0_i32_0 = arith.constant 0 : i32
    return %arg0, %c0_i32, %arg1 : i32, i32, i32
  }
  func.func @transform_2(%arg0: i32, %arg1: i32) -> (i32, i32, i32) {
    %c0_i32 = arith.constant 0 : i32
    %c0_i32_0 = arith.constant 0 : i32
    %c0_i32_1 = arith.constant 0 : i32
    return %arg0, %c0_i32, %c0_i32_0 : i32, i32, i32
  }
  func.func @transform_3(%arg0: i32, %arg1: i32) -> (i32, i32, i32) {
    %c0_i32 = arith.constant 0 : i32
    %c0_i32_0 = arith.constant 0 : i32
    return %arg0, %c0_i32, %arg1 : i32, i32, i32
  }
}

</mosaic_0001>

<llo_original>
// kernel: contrastive_head.1
$region0: #{contrastive_head.1}
  #allocation0 [shape = 'u32[]', space=smem, size = 0x4, offset = 0x4, fixed_abs, tag = 'smem constant byte address 0x4 - core index']
  #allocation1 [shape = 'u32[72,128]{1,0:T(1,128)}', space=vmem, size = 0x9000, scoped, tag = 'internal scratch']
  %s0 = inlined_call_operand.vmem [shape: f32[2], index: 0, kind: input, shape index: {}]
  %s1 = inlined_call_operand.vmem [shape: f32[2,32,256], index: 1, kind: input, shape index: {}]
  %s2 = inlined_call_operand.vmem [shape: f32[2,8,32], index: 2, kind: input, shape index: {}]
  %s3 = inlined_call_operand.vmem [shape: f32[2,8,256], index: 3, kind: output, shape index: {}]
  %s4 = sld [smem:[#allocation0]]
  $region49: #{contrastive_head.1} parent=0
    _
  %s6 = ssub.s32 1, %s4
  %s7 = scalar_select 0, %s6, %s4
  $region1: #{contrastive_head.1} parent=0
    #allocation2 [shape = 'u8[512]{0}', space=smem, size = 0x200, scoped, tag = 'input window, operand 0, single buffered']
    #allocation3 [shape = 's32[2]{0}', space=sflag, size = 0x8, scoped, tag = 'scoped memory for contrastive_head.1']
    %8 = vsyncpa [#allocation3], 0
    loop: start=0, step=1, limit=4
    $region2: #{contrastive_head.1} parent=1 // loop_pre_header
      _
    $region3: #{contrastive_head.1} parent=1 // loop_header
      %s10 = sphi 0, %s14
      %p11 = scmp.ge.s32.totalorder %s10, 4
      %s17 = sphi 0, %s29
      %s18 = sphi 0, %s25
      %s19 = sphi 0, %s17
      %s20 = sphi 0, %s18
      %s21 = sphi 0, %s19
      %s22 = sphi 0, %s20
      %s30 = sphi 0, %s30
      %s32 = sphi 0, %s30
      %s33 = sphi 0, %s32
      %s47 = sphi 0, %s33
      %s55 = sphi 0, %s57
      %s58 = sphi 0, %s55
      %s59 = sphi 0, %s58
      %s75 = sphi 0, %s59
      %s81 = sphi 0, %s83
      %s84 = sphi 0, %s81
      %s85 = sphi 0, %s84
      %s101 = sphi 0, %s85
      %s109 = sphi 0, %s111
      %s112 = sphi 0, %s109
      %s113 = sphi 0, %s112
      %s129 = sphi 0, %s113
    $region4: #{contrastive_head.1} parent=1 // loop_header_branch
      %13 = sbr.rel (%p11) target = $region8
    $region5: #{contrastive_head.1} parent=1 // loop_body
      %s15 = ssub.s32 %s10, 1
      %s16 = ssub.s32 %s10, 2
      %s23 = sadd.s32 1, %s18
      %p24 = scmp.ge.s32.totalorder %s23, 1
      %s25 = scalar_select %p24, 0, %s23
      %s26 = sadd.s32 1, %s17
      %s27 = scalar_select %p24, %s26, %s17
      %p28 = scmp.ge.s32.totalorder %s27, 2
      %s29 = scalar_select %p28, 0, %s27
      %s31 = sadd.s32 %s30, 1
      %p34 = scmp.eq.s32.totalorder %s10, 1
      %p35 = scmp.ne.s32.totalorder %s30, %s32
      %p36 = scmp.eq.s32.totalorder %s10, 0
      %p37 = por %p35, %p36
      %p38 = scmp.ne.s32.totalorder %s30, %s32
      %p39 = scmp.eq.s32.totalorder %s15, 1
      %p40 = por %p38, %p39
      %p41 = scmp.ne.s32.totalorder %s32, %s33
      %p42 = scmp.eq.s32.totalorder %s15, 0
      %p43 = por %p41, %p42
      %p44 = scmp.ne.s32.totalorder %s32, %s33
      %p45 = scmp.eq.s32.totalorder %s16, 1
      %p46 = por %p44, %p45
      %p48 = scmp.ne.s32.totalorder %s33, %s47
      %p49 = scmp.eq.s32.totalorder %s16, 0
      %p50 = por %p48, %p49
      %s51 = ssub.s32 %s17, %s29
      %s52 = ssub.s32 %s18, %s25
      %s53 = sor.u32 %s51, %s52
      %p54 = scmp.eq.s32.totalorder %s53, 0
      %s56 = sadd.s32 %s55, 1
      %s57 = scalar_select %p54, %s55, %s56
      %p60 = pneg %p54
      %p61 = scmp.eq.s32.totalorder %s10, 1
      %p62 = por %p60, %p61
      %p63 = scmp.ne.s32.totalorder %s55, %s58
      %p64 = scmp.eq.s32.totalorder %s10, 0
      %p65 = por %p63, %p64
      %p66 = scmp.ne.s32.totalorder %s55, %s58
      %p67 = scmp.eq.s32.totalorder %s15, 1
      %p68 = por %p66, %p67
      %p69 = scmp.ne.s32.totalorder %s58, %s59
      %p70 = scmp.eq.s32.totalorder %s15, 0
      %p71 = por %p69, %p70
      %p72 = scmp.ne.s32.totalorder %s58, %s59
      %p73 = scmp.eq.s32.totalorder %s16, 1
      %p74 = por %p72, %p73
      %p76 = scmp.ne.s32.totalorder %s59, %s75
      %p77 = scmp.eq.s32.totalorder %s16, 0
      %p78 = por %p76, %p77
      %s79 = ssub.s32 %s17, %s29
      %p80 = scmp.eq.s32.totalorder %s79, 0
      %s82 = sadd.s32 %s81, 1
      %s83 = scalar_select %p80, %s81, %s82
      %p86 = pneg %p80
      %p87 = scmp.eq.s32.totalorder %s10, 1
      %p88 = por %p86, %p87
      %p89 = scmp.ne.s32.totalorder %s81, %s84
      %p90 = scmp.eq.s32.totalorder %s10, 0
      %p91 = por %p89, %p90
      %p92 = scmp.ne.s32.totalorder %s81, %s84
      %p93 = scmp.eq.s32.totalorder %s15, 1
      %p94 = por %p92, %p93
      %p95 = scmp.ne.s32.totalorder %s84, %s85
      %p96 = scmp.eq.s32.totalorder %s15, 0
      %p97 = por %p95, %p96
      %p98 = scmp.ne.s32.totalorder %s84, %s85
      %p99 = scmp.eq.s32.totalorder %s16, 1
      %p100 = por %p98, %p99
      %p102 = scmp.ne.s32.totalorder %s85, %s101
      %p103 = scmp.eq.s32.totalorder %s16, 0
      %p104 = por %p102, %p103
      %s105 = ssub.s32 %s17, %s29
      %s106 = ssub.s32 %s18, %s25
      %s107 = sor.u32 %s105, %s106
      %p108 = scmp.eq.s32.totalorder %s107, 0
      %s110 = sadd.s32 %s109, 1
      %s111 = scalar_select %p108, %s109, %s110
      %p114 = pneg %p108
      %p115 = scmp.eq.s32.totalorder %s10, 1
      %p116 = por %p114, %p115
      %p117 = scmp.ne.s32.totalorder %s109, %s112
      %p118 = scmp.eq.s32.totalorder %s10, 0
      %p119 = por %p117, %p118
      %p120 = scmp.ne.s32.totalorder %s109, %s112
      %p121 = scmp.eq.s32.totalorder %s15, 1
      %p122 = por %p120, %p121
      %p123 = scmp.ne.s32.totalorder %s112, %s113
      %p124 = scmp.eq.s32.totalorder %s15, 0
      %p125 = por %p123, %p124
      %p126 = scmp.ne.s32.totalorder %s112, %s113
      %p127 = scmp.eq.s32.totalorder %s16, 1
      %p128 = por %p126, %p127
      %p130 = scmp.ne.s32.totalorder %s113, %s129
      %p131 = scmp.eq.s32.totalorder %s16, 0
      %p132 = por %p130, %p131
      %p133 = scmp.le.s32.totalorder 1, %s10
      %p134 = scmp.lt.s32.totalorder %s10, 3
      %p135 = pnand %p133, %p134
      %p136 = pneg %p135
      // Predicated region
      $region9: #{contrastive_head.1} parent=5 // pred_check
        _
      $region10: #{contrastive_head.1} parent=5 // pred_check_branch
        %138 = sbr.rel (%p135) target = $region12
      $region11: #{contrastive_head.1} parent=5 // pred_region
        %s139 = ssub.s32 %s10, 1
        // Predicated region
        $region13: #{contrastive_head.1} parent=11 // pred_check
          %p140 = pneg %p43
        $region14: #{contrastive_head.1} parent=11 // pred_check_branch
          %142 = sbr.rel (%p140) target = $region16
        $region15: #{contrastive_head.1} parent=11 // pred_region
          %144 = vsyncadd [#allocation3], 0
          %s146 = sshll.u32 %s0, 4
          %s147 = int_to_ptr.vmem [resolvable:$true] %s146
          %149 = dma.vmem_to_smem %s147, 16, [#allocation2], [#allocation3]
        $region16: #{contrastive_head.1} parent=11 // pred_fallthru
          _
      $region12: #{contrastive_head.1} parent=5 // pred_fallthru
        _
      %p150 = scmp.lt.s32.totalorder %s10, 2
      // Predicated region
      $region17: #{contrastive_head.1} parent=5 // pred_check
        %p151 = pneg %p150
      $region18: #{contrastive_head.1} parent=5 // pred_check_branch
        %153 = sbr.rel (%p151) target = $region20
      $region19: #{contrastive_head.1} parent=5 // pred_region
        // Predicated region
        $region21: #{contrastive_head.1} parent=19 // pred_check
          %p154 = pneg %p65
        $region22: #{contrastive_head.1} parent=19 // pred_check_branch
          %156 = sbr.rel (%p154) target = $region24
        $region23: #{contrastive_head.1} parent=19 // pred_region
          %s157 = smul.u32 2, %s18
          %p158 = scmp.lt.s32.totalorder %s17, 1
          %s159 = scalar_select %p158, %s17, 1
          %p160 = scmp.lt.s32.totalorder %s157, 1
          %s161 = scalar_select %p160, %s157, 1
          %s162 = smul.addr %s159, 8
          %s163 = sadd.s32 %s161, %s162
          %s164 = smul.addr %s163, 8
          %s165 = scalar_lea.vmem %s1, %s164
          %s166 = smul.u32 2, %s18
        $region24: #{contrastive_head.1} parent=19 // pred_fallthru
          _
        // Predicated region
        $region25: #{contrastive_head.1} parent=19 // pred_check
          %p167 = pneg %p91
        $region26: #{contrastive_head.1} parent=19 // pred_check_branch
          %169 = sbr.rel (%p167) target = $region28
        $region27: #{contrastive_head.1} parent=19 // pred_region
          %p170 = scmp.lt.s32.totalorder %s17, 1
          %s171 = scalar_select %p170, %s17, 1
          %s172 = smul.addr %s171, 8
          %s173 = scalar_lea.vmem %s2, %s172
        $region28: #{contrastive_head.1} parent=19 // pred_fallthru
          _
      $region20: #{contrastive_head.1} parent=5 // pred_fallthru
        _
      %p174 = scmp.le.s32.totalorder 1, %s10
      %p175 = scmp.lt.s32.totalorder %s10, 3
      %p176 = pnand %p174, %p175
      %p177 = pneg %p176
      // Predicated region
      $region29: #{contrastive_head.1} parent=5 // pred_check
        _
      $region30: #{contrastive_head.1} parent=5 // pred_check_branch
        %179 = sbr.rel (%p176) target = $region32
      $region31: #{contrastive_head.1} parent=5 // pred_region
        %s180 = ssub.s32 %s10, 1
        // Predicated region
        $region33: #{contrastive_head.1} parent=31 // pred_check
          %p181 = pneg %p43
        $region34: #{contrastive_head.1} parent=31 // pred_check_branch
          %183 = sbr.rel (%p181) target = $region36
        $region35: #{contrastive_head.1} parent=31 // pred_region
          %185 = dma.done [#allocation3], 16
        $region36: #{contrastive_head.1} parent=31 // pred_fallthru
          _
        %186 = sfence
        %p187 = pneg %p43
        %p188 = pneg %p40
        %s189 = smul.u32 2, %s20
        %p190 = scmp.lt.s32.totalorder %s19, 1
        %s191 = scalar_select %p190, %s19, 1
        %p192 = scmp.lt.s32.totalorder %s189, 1
        %s193 = scalar_select %p192, %s189, 1
        %s194 = smul.addr %s191, 8
        %s195 = sadd.s32 %s193, %s194
        %s196 = smul.addr %s195, 8
        %s197 = scalar_lea.vmem %s1, %s196
        %p198 = pneg %p71
        %p199 = pneg %p68
        %p200 = scmp.lt.s32.totalorder %s19, 1
        %s201 = scalar_select %p200, %s19, 1
        %s202 = smul.addr %s201, 8
        %s203 = scalar_lea.vmem %s2, %s202
        %p204 = pneg %p97
        %p205 = pneg %p94
        %p206 = pneg %p125
        %p207 = pneg %p122
        %s208 = smul.u32 2, %s20
        %p209 = scmp.lt.s32.totalorder %s19, 1
        %s210 = scalar_select %p209, %s19, 1
        %p211 = scmp.lt.s32.totalorder %s208, 1
        %s212 = scalar_select %p211, %s208, 1
        %s213 = smul.addr %s210, 2
        %s214 = sadd.s32 %s212, %s213
        %s215 = smul.addr %s214, 8
        %s216 = scalar_lea.vmem %s3, %s215
        %s217 = smul.u32 2, %s20
        %p218 = scmp.lt.s32.totalorder %s19, 1
        %s219 = scalar_select %p218, %s19, 1
        %p220 = scmp.lt.s32.totalorder %s217, 1
        %s221 = scalar_select %p220, %s217, 1
        %s222 = smul.addr %s219, 8
        %s223 = sadd.s32 %s221, %s222
        %s224 = smul.addr %s223, 8
        %s225 = scalar_lea.vmem %s1, %s224
        %s226 = smul.u32 2, %s20
        %p227 = scmp.lt.s32.totalorder %s19, 1
        %s228 = scalar_select %p227, %s19, 1
        %s229 = smul.addr %s228, 8
        %s230 = scalar_lea.vmem %s2, %s229
        %s231 = smul.u32 2, %s20
        %p232 = scmp.lt.s32.totalorder %s19, 1
        %s233 = scalar_select %p232, %s19, 1
        %p234 = scmp.lt.s32.totalorder %s231, 1
        %s235 = scalar_select %p234, %s231, 1
        %s236 = smul.addr %s233, 2
        %s237 = sadd.s32 %s235, %s236
        %s238 = smul.addr %s237, 8
        %s239 = scalar_lea.vmem %s3, %s238
        %s240 = smul.u32 2, %s20
        %v241 = vld [vmem:[%s225] sm:$0xff]
        %v242 = vld [vmem:[%s225 + $0x8] sm:$0xff]
        %v243 = vld [vmem:[%s225 + $0x10] sm:$0xff]
        %v244 = vld [vmem:[%s225 + $0x18] sm:$0xff]
        %v245 = vld [vmem:[%s225 + $0x20] sm:$0xff]
        %v246 = vld [vmem:[%s225 + $0x28] sm:$0xff]
        %v247 = vld [vmem:[%s225 + $0x30] sm:$0xff]
        %v248 = vld [vmem:[%s225 + $0x38] sm:$0xff]
        %v249 = vld [vmem:[%s230] sm:$0xff]
        %s250 = sld [smem:[#allocation2]]
        %s251 = sld [smem:[#allocation2 + $0x1]]
        %v252 = vmul.f32 %v249, %v249
        %vm253 = vcmask 261120
        %v254 = vsel %vm253, %v252, 0.0
        %255 = vadd.xlane.f32.xlu0 %v254
        %v256 = vpop.xlane.xlu0 %255
        %v257 = vmax.f32 %v256, 1e-24
        %v258 = vrsqrt.pop %v257
        %v259 = vmul.f32 %v258, %v257
        %v260 = vmul.f32 %v259, %v258
        %v261 = vmul.f32 0.5, %v260
        %v262 = vsub.f32 1.5, %v261
        %v263 = vmul.f32 %v258, %v262
        %vm264 = vweird.f32 %v257
        %vm265 = vweird.f32 %v258
        %vm266 = vmor %vm264, %vm265
        %v267 = vsel %vm266, %v258, %v263
        %v268 = vstv %s250
        %v269 = vmul.f32 %v268, %v267
        %v270 = vmul.f32 %v249, %v269
        %v271 = vmul.f32 %v241, %v241
        %v272 = vmul.f32 %v242, %v242
        %v273 = vmul.f32 %v243, %v243
        %v274 = vmul.f32 %v244, %v244
        %v275 = vmul.f32 %v245, %v245
        %v276 = vmul.f32 %v246, %v246
        %v277 = vmul.f32 %v247, %v247
        %v278 = vmul.f32 %v248, %v248
        %v279 = vadd.f32 %v271, %v273
        %v280 = vadd.f32 %v279, %v275
        %v281 = vadd.f32 %v280, %v277
        %v282 = vrot.slane %v281, 4
        %v283 = vadd.f32 %v281, %v282
        %v284 = vrot.slane %v283, 2
        %v285 = vadd.f32 %v283, %v284
        %v286 = vrot.slane %v285, 1
        %v287 = vadd.f32 %v285, %v286
        %v288 = vadd.f32 %v272, %v274
        %v289 = vadd.f32 %v288, %v276
        %v290 = vadd.f32 %v289, %v278
        %v291 = vrot.slane %v290, 4
        %v292 = vadd.f32 %v290, %v291
        %v293 = vrot.slane %v292, 2
        %v294 = vadd.f32 %v292, %v293
        %v295 = vrot.slane %v294, 1
        %v296 = vadd.f32 %v294, %v295
        %v297 = vmax.f32 %v287, 1e-24
        %v298 = vmax.f32 %v296, 1e-24
        %v299 = vrsqrt.pop %v297
        %v300 = vmul.f32 %v299, %v297
        %v301 = vmul.f32 %v300, %v299
        %v302 = vmul.f32 0.5, %v301
        %v303 = vsub.f32 1.5, %v302
        %v304 = vmul.f32 %v299, %v303
        %vm305 = vweird.f32 %v297
        %vm306 = vweird.f32 %v299
        %vm307 = vmor %vm305, %vm306
        %v308 = vsel %vm307, %v299, %v304
        %v309 = vrsqrt.pop %v298
        %v310 = vmul.f32 %v309, %v298
        %v311 = vmul.f32 %v310, %v309
        %v312 = vmul.f32 0.5, %v311
        %v313 = vsub.f32 1.5, %v312
        %v314 = vmul.f32 %v309, %v313
        %vm315 = vweird.f32 %v298
        %vm316 = vweird.f32 %v309
        %vm317 = vmor %vm315, %vm316
        %v318 = vsel %vm317, %v309, %v314
        %v320 = vsel %vm253, %v270, 0
        %322 = vmatpush.msra.mxu0 0.0
        %323 = vmatpush.msra.mxu0 0.0
        %324 = vmatpush.msra.mxu0 0.0
        %325 = vmatpush.msra.mxu0 0.0
        %326 = vmatpush.msra.mxu0 0.0
        %327 = vmatpush.msra.mxu0 0.0
        %328 = vmatpush.msra.mxu0 0.0
        %329 = vmatpush.msra.mxu0 0.0
        %330 = vmatpush.msra.mxu0 0.0
        %331 = vmatpush.msra.mxu0 0.0
        %332 = vmatpush.msra.mxu0 0.0
        %333 = vmatpush.msra.mxu0 0.0
        %334 = vmatpush.msra.mxu0 %v247
        %335 = vmatpush.msra.mxu0 %v245
        %336 = vmatpush.msra.mxu0 %v243
        %337 = vmatpush.msra.mxu0 %v241
        %338 = vmatmul.f32.gmra.mxu0 %v320
        %v339 = vpop.f32.mrf.mxu0
        %v340 = vadd.f32 0.0, %v339
        %341 = vdwg.mxu0
        %342 = vmatpush.msra.mxu0 0.0
        %343 = vmatpush.msra.mxu0 0.0
        %344 = vmatpush.msra.mxu0 0.0
        %345 = vmatpush.msra.mxu0 0.0
        %346 = vmatpush.msra.mxu0 0.0
        %347 = vmatpush.msra.mxu0 0.0
        %348 = vmatpush.msra.mxu0 0.0
        %349 = vmatpush.msra.mxu0 0.0
        %350 = vmatpush.msra.mxu0 0.0
        %351 = vmatpush.msra.mxu0 0.0
        %352 = vmatpush.msra.mxu0 0.0
        %353 = vmatpush.msra.mxu0 0.0
        %354 = vmatpush.msra.mxu0 %v248
        %355 = vmatpush.msra.mxu0 %v246
        %356 = vmatpush.msra.mxu0 %v244
        %357 = vmatpush.msra.mxu0 %v242
        %358 = vmatmul.f32.gmra.mxu0 %v320
        %v359 = vpop.f32.mrf.mxu0
        %v360 = vadd.f32 0.0, %v359
        %361 = vdwg.mxu0
        %v362 = vmul.f32 %v340, %v308
        %v363 = vmul.f32 %v360, %v318
        %v364 = vstv %s251
        %v365 = vadd.f32 %v362, %v364
        %v366 = vadd.f32 %v363, %v364
        %367 = vst [vmem:[%s239] sm:$0xff] %v365
        %368 = vst [vmem:[%s239 + $0x8] sm:$0xff] %v366
        %s369 = smul.u32 2, %s20
        %p370 = scmp.lt.s32.totalorder %s19, 1
        %s371 = scalar_select %p370, %s19, 1
        %p372 = scmp.lt.s32.totalorder %s369, 1
        %s373 = scalar_select %p372, %s369, 1
        %s374 = smul.addr %s371, 2
        %s375 = sadd.s32 %s373, %s374
        %s376 = smul.addr %s375, 8
        %s377 = scalar_lea.vmem %s3, %s376
        // Predicated region
        $region37: #{contrastive_head.1} parent=31 // pred_check
          %p378 = pneg %p122
        $region38: #{contrastive_head.1} parent=31 // pred_check_branch
          %380 = sbr.rel (%p378) target = $region40
        $region39: #{contrastive_head.1} parent=31 // pred_region
          %s381 = smul.u32 2, %s20
        $region40: #{contrastive_head.1} parent=31 // pred_fallthru
          _
      $region32: #{contrastive_head.1} parent=5 // pred_fallthru
        _
      %p382 = scmp.le.s32.totalorder 2, %s10
      // Predicated region
      $region41: #{contrastive_head.1} parent=5 // pred_check
        %p383 = pneg %p382
      $region42: #{contrastive_head.1} parent=5 // pred_check_branch
        %385 = sbr.rel (%p383) target = $region44
      $region43: #{contrastive_head.1} parent=5 // pred_region
        %s386 = ssub.s32 %s10, 2
        // Predicated region
        $region45: #{contrastive_head.1} parent=43 // pred_check
          %p387 = pneg %p128
        $region46: #{contrastive_head.1} parent=43 // pred_check_branch
          %389 = sbr.rel (%p387) target = $region48
        $region47: #{contrastive_head.1} parent=43 // pred_region
          %s390 = smul.u32 2, %s22
          %p391 = scmp.lt.s32.totalorder %s21, 1
          %s392 = scalar_select %p391, %s21, 1
          %p393 = scmp.lt.s32.totalorder %s390, 1
          %s394 = scalar_select %p393, %s390, 1
          %s395 = smul.addr %s392, 2
          %s396 = sadd.s32 %s394, %s395
          %s397 = smul.addr %s396, 8
          %s398 = scalar_lea.vmem %s3, %s397
        $region48: #{contrastive_head.1} parent=43 // pred_fallthru
          _
      $region44: #{contrastive_head.1} parent=5 // pred_fallthru
        _
    $region6: #{contrastive_head.1} parent=1 // loop_footer
      %s14 = sadd.s32 1, %s10
    $region7: #{contrastive_head.1} parent=1 // loop_footer_branch
      %9 = sbr.rel target = $region3
    $region8: #{contrastive_head.1} parent=1 // loop_exit
      _
    %399 = vsyncpa [#allocation3], 1
    %s400 = scalar_lea.sflag [#allocation3], 1
    %401 = vsyncpa %s400, 1

</llo_original>
